<compile_context>
chip_gen: v6e
topology: v6e:2x2x1
jax: 0.10.0
libtpu: 0.0.40
codegen_flags: <defaults>
</compile_context>

<pallas_src>
import functools

import jax
import jax.numpy as jnp
from jax.experimental import pallas as pl
from jax.experimental.pallas import tpu as pltpu


def _round_up(x, m):
    return (x + m - 1) // m * m


def _realloc_kernel(obs_ref, wts_ref, p_ref, out_ref, *, num_actions):
    """One batch tile of the full forward pass.

    obs_ref : (TB, D_pad)       zero-padded observations
    wts_ref : (TB, 128)         prev_actions shifted into lanes 25..25+A-1
    p_ref   : (D_pad+264, 128)  packed parameter slab (VMEM-resident)
    out_ref : (TB, 128)         lanes 0..A-1 = tanh(logits), lane A = value
    """
    d_pad = obs_ref.shape[1]
    r_w2 = d_pad               # start of w2 rows
    r_wh = r_w2 + 128          # start of fused-head rows
    r_b = r_wh + 128           # start of bias rows

    obs = obs_ref[...]                                   # (TB, D_pad)

    w1 = p_ref[0:d_pad, :]                               # (D_pad, 128)
    w2 = p_ref[r_w2:r_wh, :]                             # (128, 128)
    wh = p_ref[r_wh:r_b, :]                              # (128, 128) fused head
    b1 = p_ref[r_b + 0:r_b + 1, :]                       # (1, 128)
    b2 = p_ref[r_b + 1:r_b + 2, :]                       # (1, 128)
    bh = p_ref[r_b + 2:r_b + 3, :]                       # (1, 128)

    # Trunk: Linear -> ReLU -> Linear -> ReLU.  Lanes beyond the real feature
    # widths (100 / 25) stay exactly zero thanks to zero-padded weights/biases.
    h1 = jnp.maximum(
        jnp.dot(obs, w1, preferred_element_type=jnp.float32) + b1, 0.0)
    h2 = jnp.maximum(
        jnp.dot(h1, w2, preferred_element_type=jnp.float32) + b2, 0.0)

    # X = concat([h2, prev_actions]): h2 occupies lanes 0..24 (lanes >= 25 are
    # zero) and prev_actions were pre-shifted into lanes 25..25+A-1, so a
    # single VPU add realizes the concat for free.
    x = h2 + wts_ref[...]                                # (TB, 128)

    # Single fused head matmul: policy logits in cols 0..A-1, value in col A.
    raw = jnp.dot(x, wh, preferred_element_type=jnp.float32) + bh  # (TB, 128)

    # NaN -> 1 then tanh, applied to policy lanes only; value lane stays raw.
    lane = jax.lax.broadcasted_iota(jnp.int32, raw.shape, 1)
    is_logit = lane < num_actions
    fixed = jnp.where(jnp.isnan(raw), jnp.float32(1.0), raw)
    out_ref[...] = jnp.where(is_logit, jnp.tanh(fixed), raw)


def realloc_forward(obs, prev_actions, packed_params, num_assets, tile_b=None):
    """Returns (tanh_logits (B, m+1), value (B,))."""
    A = num_assets + 1
    B, obs_dim = obs.shape
    d_pad = _round_up(obs_dim, 128)

    if tile_b is None:
        tile_b = min(512, _round_up(B, 8))
    tile_b = _round_up(tile_b, 8)
    b_pad = _round_up(B, tile_b)
    num_tiles = b_pad // tile_b

    obs = obs.astype(jnp.float32)
    prev_actions = prev_actions.astype(jnp.float32)

    # Zero-pad batch + features (skipped when already aligned); shift
    # prev_actions into lanes 25..25+A-1 of a 128-lane slab.
    if b_pad != B or d_pad != obs_dim:
        obs_p = jnp.pad(obs, ((0, b_pad - B), (0, d_pad - obs_dim)))
    else:
        obs_p = obs
    wts_p = jnp.pad(prev_actions, ((0, b_pad - B), (25, 128 - 25 - A)))

    kernel = functools.partial(_realloc_kernel, num_actions=A)

    out = pl.pallas_call(
        kernel,
        out_shape=jax.ShapeDtypeStruct((b_pad, 128), jnp.float32),
        grid_spec=pltpu.PrefetchScalarGridSpec(
            num_scalar_prefetch=0,
            grid=(num_tiles,),
            in_specs=[
                pl.BlockSpec((tile_b, d_pad), lambda i: (i, 0)),       # obs stream
                pl.BlockSpec((tile_b, 128), lambda i: (i, 0)),         # prev_actions
                pl.BlockSpec(packed_params.shape, lambda i: (0, 0)),   # weights (resident)
            ],
            out_specs=pl.BlockSpec((tile_b, 128), lambda i: (i, 0)),
        ),
        compiler_params=pltpu.CompilerParams(
            dimension_semantics=("parallel",)),
    )(obs_p, wts_p, packed_params)

    tanh_logits = out[:B, :A]
    value = out[:B, A]          # value_function(): squeeze(-1)
    return tanh_logits, value


def init_params(key, obs_dim, num_assets):
    """nn.Linear-style init (uniform +-1/sqrt(fan_in)), stored as (in, out)."""
    A = num_assets + 1
    x_dim = 25 + A

    def linear(k, fan_in, fan_out):
        kw, kb = jax.random.split(k)
        bound = 1.0 / jnp.sqrt(jnp.float32(fan_in))
        w = jax.random.uniform(kw, (fan_in, fan_out), jnp.float32, -bound, bound)
        b = jax.random.uniform(kb, (fan_out,), jnp.float32, -bound, bound)
        return w, b

    k1, k2, k3, k4 = jax.random.split(key, 4)
    w1, b1 = linear(k1, obs_dim, 100)
    w2, b2 = linear(k2, 100, 25)
    wp, bp = linear(k3, x_dim, A)     # policy head over X = [H, prev_actions]
    wv, bv = linear(k4, x_dim, 1)     # value head over X
    return (w1, b1, w2, b2, wp, bp, wv, bv)


def pack_params(raw_params, obs_dim, num_assets):
    """Pack all weights/biases into a single lane-dense (D_pad+264, 128) slab."""
    w1, b1, w2, b2, wp, bp, wv, bv = raw_params
    A = num_assets + 1
    assert 25 + A <= 128 and A + 1 <= 128, "num_assets too large for 128-lane packing"
    d_pad = _round_up(obs_dim, 128)

    w1p = jnp.zeros((d_pad, 128), jnp.float32).at[:obs_dim, :100].set(w1)
    w2p = jnp.zeros((128, 128), jnp.float32).at[:100, :25].set(w2)

    # Fused head: rows 0..24 <- H-part, rows 25..25+A-1 <- prev_actions part;
    # cols 0..A-1 <- policy head, col A <- value head.
    whp = jnp.zeros((128, 128), jnp.float32)
    whp = whp.at[:25, :A].set(wp[:25, :])
    whp = whp.at[25:25 + A, :A].set(wp[25:, :])
    whp = whp.at[:25, A].set(wv[:25, 0])
    whp = whp.at[25:25 + A, A].set(wv[25:, 0])

    bias_blk = jnp.zeros((8, 128), jnp.float32)
    bias_blk = bias_blk.at[0, :100].set(b1)
    bias_blk = bias_blk.at[1, :25].set(b2)
    bias_blk = bias_blk.at[2, :A].set(bp)
    bias_blk = bias_blk.at[2, A].set(bv[0])

    return jnp.concatenate([w1p, w2p, whp, bias_blk], axis=0)  # (d_pad+264, 128)


def _reference(obs, prev_actions, raw_params):
    """Pure-JAX reference of the PyTorch forward."""
    w1, b1, w2, b2, wp, bp, wv, bv = raw_params
    h = jnp.maximum(obs @ w1 + b1, 0.0)
    h = jnp.maximum(h @ w2 + b2, 0.0)
    x = jnp.concatenate([h, prev_actions], axis=1)
    logits = x @ wp + bp
    value = x @ wv + bv
    logits = jnp.where(jnp.isnan(logits), 1.0, logits)
    return jnp.tanh(logits), jnp.squeeze(value, -1)


if __name__ == "__main__":
    OBS_DIM = 32     # np.product(obs_space.shape)
    NUM_ASSETS = 4   # m  ->  action dim = m + 1 = 5

    key = jax.random.PRNGKey(0)
    k_param, k_obs, k_act, k_obs2, k_act2 = jax.random.split(key, 5)

    raw_params = init_params(k_param, OBS_DIM, NUM_ASSETS)
    packed = pack_params(raw_params, OBS_DIM, NUM_ASSETS)

    # --- small batch (B = 8, single tile) ---
    B = 8
    obs = jax.random.normal(k_obs, (B, OBS_DIM), jnp.float32)
    prev_actions = jax.nn.softmax(
        jax.random.normal(k_act, (B, NUM_ASSETS + 1), jnp.float32), axis=-1)

    tanh_logits, value = realloc_forward(obs, prev_actions, packed, NUM_ASSETS)
    jax.block_until_ready((tanh_logits, value))

    ref_logits, ref_value = _reference(obs, prev_actions, raw_params)
    assert tanh_logits.shape == (B, NUM_ASSETS + 1)
    assert value.shape == (B,)
    assert jnp.allclose(tanh_logits, ref_logits, atol=1e-4, rtol=1e-4)
    assert jnp.allclose(value, ref_value, atol=1e-4, rtol=1e-4)

    # --- ragged batch exercising the grid + padding path (B = 40, TB = 16) ---
    B2 = 40
    obs2 = jax.random.normal(k_obs2, (B2, OBS_DIM), jnp.float32)
    prev2 = jax.nn.softmax(
        jax.random.normal(k_act2, (B2, NUM_ASSETS + 1), jnp.float32), axis=-1)
    tl2, v2 = realloc_forward(obs2, prev2, packed, NUM_ASSETS, tile_b=16)
    jax.block_until_ready((tl2, v2))
    rl2, rv2 = _reference(obs2, prev2, raw_params)
    assert jnp.allclose(tl2, rl2, atol=1e-4, rtol=1e-4)
    assert jnp.allclose(v2, rv2, atol=1e-4, rtol=1e-4)

    print("KERNEL_OK")
</pallas_src>

<mosaic_0001>
module attributes {stable_mosaic.version = 11 : i64} {
  func.func @_realloc_kernel(%arg0: i32, %arg1: memref<8x128xf32, #tpu.memory_space<vmem>>, %arg2: memref<8x128xf32, #tpu.memory_space<vmem>>, %arg3: memref<392x128xf32, #tpu.memory_space<vmem>>, %arg4: memref<8x128xf32, #tpu.memory_space<vmem>>) attributes {dimension_semantics = [#tpu.dimension_semantics<parallel>], iteration_bounds = array<i64: 1>, scalar_prefetch = 0 : i64, scratch_operands = 0 : i64, tpu.core_type = #tpu.core_type<tc>, window_params = [{transform_indices = @transform_0, window_bounds = array<i64: 8, 128>}, {transform_indices = @transform_1, window_bounds = array<i64: 8, 128>}, {pipeline_mode = #tpu.pipeline_mode<synchronous>, transform_indices = @transform_2, window_bounds = array<i64: 392, 128>}, {transform_indices = @transform_3, window_bounds = array<i64: 8, 128>}]} {
    %c0 = arith.constant 0 : index
    %c0_0 = arith.constant 0 : index
    %0 = vector.load %arg1[%c0, %c0_0] : memref<8x128xf32, #tpu.memory_space<vmem>>, vector<8x128xf32>
    %c0_1 = arith.constant 0 : index
    %c0_2 = arith.constant 0 : index
    %1 = vector.load %arg3[%c0_1, %c0_2] : memref<392x128xf32, #tpu.memory_space<vmem>>, vector<128x128xf32>
    %c128 = arith.constant 128 : index
    %c0_3 = arith.constant 0 : index
    %2 = vector.load %arg3[%c128, %c0_3] : memref<392x128xf32, #tpu.memory_space<vmem>>, vector<128x128xf32>
    %c256 = arith.constant 256 : index
    %c0_4 = arith.constant 0 : index
    %3 = vector.load %arg3[%c256, %c0_4] : memref<392x128xf32, #tpu.memory_space<vmem>>, vector<128x128xf32>
    %c384 = arith.constant 384 : index
    %c0_5 = arith.constant 0 : index
    %4 = vector.load %arg3[%c384, %c0_5] : memref<392x128xf32, #tpu.memory_space<vmem>>, vector<1x128xf32>
    %c385 = arith.constant 385 : index
    %c0_6 = arith.constant 0 : index
    %5 = vector.load %arg3[%c385, %c0_6] : memref<392x128xf32, #tpu.memory_space<vmem>>, vector<1x128xf32>
    %c386 = arith.constant 386 : index
    %c0_7 = arith.constant 0 : index
    %6 = vector.load %arg3[%c386, %c0_7] : memref<392x128xf32, #tpu.memory_space<vmem>>, vector<1x128xf32>
    %cst = arith.constant dense<0.000000e+00> : vector<8x128xf32>
    %7 = tpu.matmul %0, %1, %cst {dimension_numbers = #tpu.dot_dimension_numbers<[1], [0], [0], [1], [0, 0, 1, 1], [], []>} : vector<8x128xf32>, vector<128x128xf32>, vector<8x128xf32> -> vector<8x128xf32>
    %8 = vector.broadcast %4 : vector<1x128xf32> to vector<8x128xf32>
    %9 = arith.addf %7, %8 : vector<8x128xf32>
    %cst_8 = arith.constant 0.000000e+00 : f32
    %10 = vector.broadcast %cst_8 : f32 to vector<8x128xf32>
    %11 = arith.maximumf %9, %10 : vector<8x128xf32>
    %cst_9 = arith.constant dense<0.000000e+00> : vector<8x128xf32>
    %12 = tpu.matmul %11, %2, %cst_9 {dimension_numbers = #tpu.dot_dimension_numbers<[1], [0], [0], [1], [0, 0, 1, 1], [], []>} : vector<8x128xf32>, vector<128x128xf32>, vector<8x128xf32> -> vector<8x128xf32>
    %13 = vector.broadcast %5 : vector<1x128xf32> to vector<8x128xf32>
    %14 = arith.addf %12, %13 : vector<8x128xf32>
    %cst_10 = arith.constant 0.000000e+00 : f32
    %15 = vector.broadcast %cst_10 : f32 to vector<8x128xf32>
    %16 = arith.maximumf %14, %15 : vector<8x128xf32>
    %c0_11 = arith.constant 0 : index
    %c0_12 = arith.constant 0 : index
    %17 = vector.load %arg2[%c0_11, %c0_12] : memref<8x128xf32, #tpu.memory_space<vmem>>, vector<8x128xf32>
    %18 = arith.addf %16, %17 : vector<8x128xf32>
    %cst_13 = arith.constant dense<0.000000e+00> : vector<8x128xf32>
    %19 = tpu.matmul %18, %3, %cst_13 {dimension_numbers = #tpu.dot_dimension_numbers<[1], [0], [0], [1], [0, 0, 1, 1], [], []>} : vector<8x128xf32>, vector<128x128xf32>, vector<8x128xf32> -> vector<8x128xf32>
    %20 = vector.broadcast %6 : vector<1x128xf32> to vector<8x128xf32>
    %21 = arith.addf %19, %20 : vector<8x128xf32>
    %22 = tpu.iota {dimensions = array<i32: 1>} : vector<8x128xi32>
    %c5_i32 = arith.constant 5 : i32
    %23 = vector.broadcast %c5_i32 : i32 to vector<8x128xi32>
    %24 = arith.cmpi slt, %22, %23 : vector<8x128xi32>
    %25 = arith.cmpf one, %21, %21 : vector<8x128xf32>
    %cst_14 = arith.constant 1.000000e+00 : f32
    %26 = vector.broadcast %cst_14 : f32 to vector<8x128xf32>
    %27 = arith.select %25, %26, %21 : vector<8x128xi1>, vector<8x128xf32>
    %28 = math.tanh %27 : vector<8x128xf32>
    %29 = arith.select %24, %28, %21 : vector<8x128xi1>, vector<8x128xf32>
    %c0_15 = arith.constant 0 : index
    %c0_16 = arith.constant 0 : index
    %30 = vector.load %arg4[%c0_15, %c0_16] : memref<8x128xf32, #tpu.memory_space<vmem>>, vector<8x128xf32>
    tpu.vector_store %arg4[%c0_15, %c0_16], %29 {strides = array<i32>} : memref<8x128xf32, #tpu.memory_space<vmem>>, vector<8x128xf32>,
    return
  }
  func.func @transform_0(%arg0: i32) -> (i32, i32) {
    %c0_i32 = arith.constant 0 : i32
    %c0_i32_0 = arith.constant 0 : i32
    return %arg0, %c0_i32 : i32, i32
  }
  func.func @transform_1(%arg0: i32) -> (i32, i32) {
    %c0_i32 = arith.constant 0 : i32
    %c0_i32_0 = arith.constant 0 : i32
    return %arg0, %c0_i32 : i32, i32
  }
  func.func @transform_2(%arg0: i32) -> (i32, i32) {
    %c0_i32 = arith.constant 0 : i32
    %c0_i32_0 = arith.constant 0 : i32
    %c0_i32_1 = arith.constant 0 : i32
    return %c0_i32, %c0_i32_0 : i32, i32
  }
  func.func @transform_3(%arg0: i32) -> (i32, i32) {
    %c0_i32 = arith.constant 0 : i32
    %c0_i32_0 = arith.constant 0 : i32
    return %arg0, %c0_i32 : i32, i32
  }
}

</mosaic_0001>

<llo_original>
// kernel: tpu_custom_call.1
$region0: #{tpu_custom_call.1}
  #allocation0 [shape = 'u32[]', space=smem, size = 0x4, offset = 0x4, fixed_abs, tag = 'smem constant byte address 0x4 - core index']
  #allocation1 [shape = 'u32[144,128]{1,0:T(1,128)}', space=vmem, size = 0x12000, scoped, tag = 'internal scratch']
  %s0 = inlined_call_operand.hbm [shape: f32[8,128], index: 0, kind: input, shape index: {}]
  %s1 = inlined_call_operand.hbm [shape: f32[8,128], index: 1, kind: input, shape index: {}]
  %s2 = inlined_call_operand.hbm [shape: f32[392,128], index: 2, kind: input, shape index: {}]
  %s3 = inlined_call_operand.hbm [shape: f32[8,128], index: 3, kind: output, shape index: {}]
  %s4 = sld [smem:[#allocation0]]
  $region34: #{tpu_custom_call.1} parent=0
    _
  %s6 = ssub.s32 1, %s4
  %s7 = scalar_select 0, %s6, %s4
  $region1: #{tpu_custom_call.1} parent=0
    #allocation2 [shape = 'u8[4096]{0}', space=vmem, size = 0x1000, scoped, tag = 'input window, operand 0, single buffered']
    #allocation3 [shape = 's32[1]{0}', space=sflag, size = 0x4, scoped, tag = 'scoped memory for tpu_custom_call.1']
    #allocation4 [shape = 's32[1]{0}', space=sflag, size = 0x4, scoped, tag = 'scoped memory for tpu_custom_call.1']
    #allocation5 [shape = 'u8[4096]{0}', space=vmem, size = 0x1000, scoped, tag = 'input window, operand 1, single buffered']
    #allocation6 [shape = 's32[1]{0}', space=sflag, size = 0x4, scoped, tag = 'scoped memory for tpu_custom_call.1']
    #allocation7 [shape = 'u8[200704]{0}', space=vmem, size = 0x31000, scoped, tag = 'input window, operand 2, single buffered']
    #allocation8 [shape = 'u8[4096]{0}', space=vmem, size = 0x1000, scoped, tag = 'output window, operand 0, single buffered']
    %8 = vsyncpa [#allocation3], 0
    %9 = vsyncpa [#allocation6], 0
    %10 = vsyncpa [#allocation4], 0
    // Predicated region
    $region2: #{tpu_custom_call.1} parent=1 // pred_check
      _
    $region3: #{tpu_custom_call.1} parent=1 // pred_check_branch
      %12 = sbr.rel (0) target = $region5
    $region4: #{tpu_custom_call.1} parent=1 // pred_region
      %s14 = ssub.s32 128, 128
      %15 = vsyncadd [#allocation3], %s14
      %s17 = sshll.u32 [#allocation2], 4
      %s18 = int_to_ptr.vmem [resolvable:$true] %s17
      %20 = dma.hbm_to_vmem [thread:$0]  %s0, 128, %s18, [#allocation3]
    $region5: #{tpu_custom_call.1} parent=1 // pred_fallthru
      _
    // Predicated region
    $region6: #{tpu_custom_call.1} parent=1 // pred_check
      _
    $region7: #{tpu_custom_call.1} parent=1 // pred_check_branch
      %22 = sbr.rel (0) target = $region9
    $region8: #{tpu_custom_call.1} parent=1 // pred_region
      %s24 = ssub.s32 128, 128
      %25 = vsyncadd [#allocation6], %s24
      %s27 = sshll.u32 [#allocation5], 4
      %s28 = int_to_ptr.vmem [resolvable:$true] %s27
      %30 = dma.hbm_to_vmem [thread:$0]  %s1, 128, %s28, [#allocation6]
    $region9: #{tpu_custom_call.1} parent=1 // pred_fallthru
      _
    // Predicated region
    $region10: #{tpu_custom_call.1} parent=1 // pred_check
      _
    $region11: #{tpu_custom_call.1} parent=1 // pred_check_branch
      %32 = sbr.rel (0) target = $region13
    $region12: #{tpu_custom_call.1} parent=1 // pred_region
      %s34 = ssub.s32 6272, 6272
      %35 = vsyncadd [#allocation6], %s34
      %s36 = sshll.u32 [#allocation7], 4
      %s37 = int_to_ptr.vmem [resolvable:$true] %s36
      %42 = dma.hbm_to_vmem [thread:$0]  %s2, 6272, %s37, [#allocation6], 128, 128, 8
    $region13: #{tpu_custom_call.1} parent=1 // pred_fallthru
      _
    // Predicated region
    $region14: #{tpu_custom_call.1} parent=1 // pred_check
      _
    $region15: #{tpu_custom_call.1} parent=1 // pred_check_branch
      %44 = sbr.rel (0) target = $region17
    $region16: #{tpu_custom_call.1} parent=1 // pred_region
      %45 = dma.done [#allocation3], 128
    $region17: #{tpu_custom_call.1} parent=1 // pred_fallthru
      _
    // Predicated region
    $region18: #{tpu_custom_call.1} parent=1 // pred_check
      _
    $region19: #{tpu_custom_call.1} parent=1 // pred_check_branch
      %47 = sbr.rel (0) target = $region21
    $region20: #{tpu_custom_call.1} parent=1 // pred_region
      %48 = dma.done [#allocation6], 128
    $region21: #{tpu_custom_call.1} parent=1 // pred_fallthru
      _
    // Predicated region
    $region22: #{tpu_custom_call.1} parent=1 // pred_check
      _
    $region23: #{tpu_custom_call.1} parent=1 // pred_check_branch
      %50 = sbr.rel (0) target = $region25
    $region24: #{tpu_custom_call.1} parent=1 // pred_region
      %51 = dma.done [#allocation6], 6272
    $region25: #{tpu_custom_call.1} parent=1 // pred_fallthru
      _
    %v52 = vld [vmem:[#allocation2] sm:$0xff]
    %v53 = vld [vmem:[#allocation7] sm:$0xff]
    %v54 = vld [vmem:[#allocation7 + $0x8] sm:$0xff]
    %v55 = vld [vmem:[#allocation7 + $0x10] sm:$0xff]
    %v56 = vld [vmem:[#allocation7 + $0x18] sm:$0xff]
    %v57 = vld [vmem:[#allocation7 + $0x20] sm:$0xff]
    %v58 = vld [vmem:[#allocation7 + $0x28] sm:$0xff]
    %v59 = vld [vmem:[#allocation7 + $0x30] sm:$0xff]
    %v60 = vld [vmem:[#allocation7 + $0x38] sm:$0xff]
    %v61 = vld [vmem:[#allocation7 + $0x40] sm:$0xff]
    %v62 = vld [vmem:[#allocation7 + $0x48] sm:$0xff]
    %v63 = vld [vmem:[#allocation7 + $0x50] sm:$0xff]
    %v64 = vld [vmem:[#allocation7 + $0x58] sm:$0xff]
    %v65 = vld [vmem:[#allocation7 + $0x60] sm:$0xff]
    %v66 = vld [vmem:[#allocation7 + $0x68] sm:$0xff]
    %v67 = vld [vmem:[#allocation7 + $0x70] sm:$0xff]
    %v68 = vld [vmem:[#allocation7 + $0x78] sm:$0xff]
    %v69 = vld [vmem:[#allocation7 + $0x80] sm:$0xff]
    %v70 = vld [vmem:[#allocation7 + $0x88] sm:$0xff]
    %v71 = vld [vmem:[#allocation7 + $0x90] sm:$0xff]
    %v72 = vld [vmem:[#allocation7 + $0x98] sm:$0xff]
    %v73 = vld [vmem:[#allocation7 + $0xa0] sm:$0xff]
    %v74 = vld [vmem:[#allocation7 + $0xa8] sm:$0xff]
    %v75 = vld [vmem:[#allocation7 + $0xb0] sm:$0xff]
    %v76 = vld [vmem:[#allocation7 + $0xb8] sm:$0xff]
    %v77 = vld [vmem:[#allocation7 + $0xc0] sm:$0xff]
    %v78 = vld [vmem:[#allocation7 + $0xc8] sm:$0xff]
    %v79 = vld [vmem:[#allocation7 + $0xd0] sm:$0xff]
    %v80 = vld [vmem:[#allocation7 + $0xd8] sm:$0xff]
    %v81 = vld [vmem:[#allocation7 + $0xe0] sm:$0xff]
    %v82 = vld [vmem:[#allocation7 + $0xe8] sm:$0xff]
    %v83 = vld [vmem:[#allocation7 + $0xf0] sm:$0xff]
    %v84 = vld [vmem:[#allocation7 + $0xf8] sm:$0xff]
    %v85 = vld [vmem:[#allocation7 + $0x100] sm:$0xff]
    %v86 = vld [vmem:[#allocation7 + $0x108] sm:$0xff]
    %v87 = vld [vmem:[#allocation7 + $0x110] sm:$0xff]
    %v88 = vld [vmem:[#allocation7 + $0x118] sm:$0xff]
    %v89 = vld [vmem:[#allocation7 + $0x120] sm:$0xff]
    %v90 = vld [vmem:[#allocation7 + $0x128] sm:$0xff]
    %v91 = vld [vmem:[#allocation7 + $0x130] sm:$0xff]
    %v92 = vld [vmem:[#allocation7 + $0x138] sm:$0xff]
    %v93 = vld [vmem:[#allocation7 + $0x140] sm:$0xff]
    %v94 = vld [vmem:[#allocation7 + $0x148] sm:$0xff]
    %v95 = vld [vmem:[#allocation7 + $0x150] sm:$0xff]
    %v96 = vld [vmem:[#allocation7 + $0x158] sm:$0xff]
    %v97 = vld [vmem:[#allocation7 + $0x160] sm:$0xff]
    %v98 = vld [vmem:[#allocation7 + $0x168] sm:$0xff]
    %v99 = vld [vmem:[#allocation7 + $0x170] sm:$0xff]
    %v100 = vld [vmem:[#allocation7 + $0x178] sm:$0xff]
    %v101 = vld [vmem:[#allocation7 + $0x180] sm:$0x1]
    %v102 = vld [vmem:[#allocation7 + $0x181] sm:$0x1]
    %v103 = vld [vmem:[#allocation7 + $0x182] sm:$0x1]
    %v104 = vlaneseq
    %v105 = vshrl.u32 %v104, 7
    %v106 = vsub.s32 0, %v105
    %v107 = vrot.slane %v101, %v106
    %108 = vmatprep.subr.mxu0 0.0
    %109 = vmatpush1.msra.mxu0 %v68
    %110 = vmatprep.subr.mxu0 0.0
    %111 = vmatpush1.msra.mxu0 %v67
    %112 = vmatprep.subr.mxu0 0.0
    %113 = vmatpush1.msra.mxu0 %v66
    %114 = vmatprep.subr.mxu0 0.0
    %115 = vmatpush1.msra.mxu0 %v65
    %116 = vmatprep.subr.mxu0 0.0
    %117 = vmatpush1.msra.mxu0 %v64
    %118 = vmatprep.subr.mxu0 0.0
    %119 = vmatpush1.msra.mxu0 %v63
    %120 = vmatprep.subr.mxu0 0.0
    %121 = vmatpush1.msra.mxu0 %v62
    %122 = vmatprep.subr.mxu0 0.0
    %123 = vmatpush1.msra.mxu0 %v61
    %124 = vmatprep.subr.mxu0 0.0
    %125 = vmatpush1.msra.mxu0 %v60
    %126 = vmatprep.subr.mxu0 0.0
    %127 = vmatpush1.msra.mxu0 %v59
    %128 = vmatprep.subr.mxu0 0.0
    %129 = vmatpush1.msra.mxu0 %v58
    %130 = vmatprep.subr.mxu0 0.0
    %131 = vmatpush1.msra.mxu0 %v57
    %132 = vmatprep.subr.mxu0 0.0
    %133 = vmatpush1.msra.mxu0 %v56
    %134 = vmatprep.subr.mxu0 0.0
    %135 = vmatpush1.msra.mxu0 %v55
    %136 = vmatprep.subr.mxu0 0.0
    %137 = vmatpush1.msra.mxu0 %v54
    %138 = vmatprep.subr.mxu0 0.0
    %139 = vmatpush1.msra.mxu0 %v53
    %140 = vmatprep.subr.mxu0 0.0
    %141 = vmatpush2.msra.mxu0 0.0
    %142 = vmatprep.subr.mxu0 0.0
    %143 = vmatpush2.msra.mxu0 0.0
    %144 = vmatprep.subr.mxu0 0.0
    %145 = vmatpush2.msra.mxu0 0.0
    %146 = vmatprep.subr.mxu0 0.0
    %147 = vmatpush2.msra.mxu0 0.0
    %148 = vmatprep.subr.mxu0 0.0
    %149 = vmatpush2.msra.mxu0 0.0
    %150 = vmatprep.subr.mxu0 0.0
    %151 = vmatpush2.msra.mxu0 0.0
    %152 = vmatprep.subr.mxu0 0.0
    %153 = vmatpush2.msra.mxu0 0.0
    %154 = vmatprep.subr.mxu0 0.0
    %155 = vmatpush2.msra.mxu0 0.0
    %156 = vmatprep.subr.mxu0 0.0
    %157 = vmatpush2.msra.mxu0 0.0
    %158 = vmatprep.subr.mxu0 0.0
    %159 = vmatpush2.msra.mxu0 0.0
    %160 = vmatprep.subr.mxu0 0.0
    %161 = vmatpush2.msra.mxu0 0.0
    %162 = vmatprep.subr.mxu0 0.0
    %163 = vmatpush2.msra.mxu0 0.0
    %164 = vmatprep.subr.mxu0 0.0
    %165 = vmatpush2.msra.mxu0 0.0
    %166 = vmatprep.subr.mxu0 0.0
    %167 = vmatpush2.msra.mxu0 0.0
    %168 = vmatprep.subr.mxu0 0.0
    %169 = vmatpush2.msra.mxu0 0.0
    %170 = vmatprep.subr.mxu0 0.0
    %171 = vmatpush2.msra.mxu0 0.0
    %172 = vmatprep.mubr.f32.mxu0 0.0
    %173 = vmatmul.mubr.f32.gmra.mxu0 %v52
    %v174 = vpop.f32.mrf.mxu0
    %v175 = vadd.f32 %v107, %v174
    %v176 = vpop.f32.mrf.mxu0
    %177 = vdwg.mxu0
    %v178 = vmax.f32 %v175, 0.0
    %v179 = vlaneseq
    %v180 = vshrl.u32 %v179, 7
    %v181 = vsub.s32 0, %v180
    %v182 = vrot.slane %v102, %v181
    %183 = vmatprep.subr.mxu0 0.0
    %184 = vmatpush1.msra.mxu0 %v84
    %185 = vmatprep.subr.mxu0 0.0
    %186 = vmatpush1.msra.mxu0 %v83
    %187 = vmatprep.subr.mxu0 0.0
    %188 = vmatpush1.msra.mxu0 %v82
    %189 = vmatprep.subr.mxu0 0.0
    %190 = vmatpush1.msra.mxu0 %v81
    %191 = vmatprep.subr.mxu0 0.0
    %192 = vmatpush1.msra.mxu0 %v80
    %193 = vmatprep.subr.mxu0 0.0
    %194 = vmatpush1.msra.mxu0 %v79
    %195 = vmatprep.subr.mxu0 0.0
    %196 = vmatpush1.msra.mxu0 %v78
    %197 = vmatprep.subr.mxu0 0.0
    %198 = vmatpush1.msra.mxu0 %v77
    %199 = vmatprep.subr.mxu0 0.0
    %200 = vmatpush1.msra.mxu0 %v76
    %201 = vmatprep.subr.mxu0 0.0
    %202 = vmatpush1.msra.mxu0 %v75
    %203 = vmatprep.subr.mxu0 0.0
    %204 = vmatpush1.msra.mxu0 %v74
    %205 = vmatprep.subr.mxu0 0.0
    %206 = vmatpush1.msra.mxu0 %v73
    %207 = vmatprep.subr.mxu0 0.0
    %208 = vmatpush1.msra.mxu0 %v72
    %209 = vmatprep.subr.mxu0 0.0
    %210 = vmatpush1.msra.mxu0 %v71
    %211 = vmatprep.subr.mxu0 0.0
    %212 = vmatpush1.msra.mxu0 %v70
    %213 = vmatprep.subr.mxu0 0.0
    %214 = vmatpush1.msra.mxu0 %v69
    %215 = vmatprep.subr.mxu0 0.0
    %216 = vmatpush2.msra.mxu0 0.0
    %217 = vmatprep.subr.mxu0 0.0
    %218 = vmatpush2.msra.mxu0 0.0
    %219 = vmatprep.subr.mxu0 0.0
    %220 = vmatpush2.msra.mxu0 0.0
    %221 = vmatprep.subr.mxu0 0.0
    %222 = vmatpush2.msra.mxu0 0.0
    %223 = vmatprep.subr.mxu0 0.0
    %224 = vmatpush2.msra.mxu0 0.0
    %225 = vmatprep.subr.mxu0 0.0
    %226 = vmatpush2.msra.mxu0 0.0
    %227 = vmatprep.subr.mxu0 0.0
    %228 = vmatpush2.msra.mxu0 0.0
    %229 = vmatprep.subr.mxu0 0.0
    %230 = vmatpush2.msra.mxu0 0.0
    %231 = vmatprep.subr.mxu0 0.0
    %232 = vmatpush2.msra.mxu0 0.0
    %233 = vmatprep.subr.mxu0 0.0
    %234 = vmatpush2.msra.mxu0 0.0
    %235 = vmatprep.subr.mxu0 0.0
    %236 = vmatpush2.msra.mxu0 0.0
    %237 = vmatprep.subr.mxu0 0.0
    %238 = vmatpush2.msra.mxu0 0.0
    %239 = vmatprep.subr.mxu0 0.0
    %240 = vmatpush2.msra.mxu0 0.0
    %241 = vmatprep.subr.mxu0 0.0
    %242 = vmatpush2.msra.mxu0 0.0
    %243 = vmatprep.subr.mxu0 0.0
    %244 = vmatpush2.msra.mxu0 0.0
    %245 = vmatprep.subr.mxu0 0.0
    %246 = vmatpush2.msra.mxu0 0.0
    %247 = vmatprep.mubr.f32.mxu0 0.0
    %248 = vmatmul.mubr.f32.gmra.mxu0 %v178
    %v249 = vpop.f32.mrf.mxu0
    %v250 = vadd.f32 %v182, %v249
    %v251 = vpop.f32.mrf.mxu0
    %252 = vdwg.mxu0
    %v253 = vmax.f32 %v250, 0.0
    %v254 = vld [vmem:[#allocation5] sm:$0xff]
    %v255 = vadd.f32 %v253, %v254
    %v256 = vlaneseq
    %v257 = vshrl.u32 %v256, 7
    %v258 = vsub.s32 0, %v257
    %v259 = vrot.slane %v103, %v258
    %260 = vmatprep.subr.mxu0 0.0
    %261 = vmatpush1.msra.mxu0 %v100
    %262 = vmatprep.subr.mxu0 0.0
    %263 = vmatpush1.msra.mxu0 %v99
    %264 = vmatprep.subr.mxu0 0.0
    %265 = vmatpush1.msra.mxu0 %v98
    %266 = vmatprep.subr.mxu0 0.0
    %267 = vmatpush1.msra.mxu0 %v97
    %268 = vmatprep.subr.mxu0 0.0
    %269 = vmatpush1.msra.mxu0 %v96
    %270 = vmatprep.subr.mxu0 0.0
    %271 = vmatpush1.msra.mxu0 %v95
    %272 = vmatprep.subr.mxu0 0.0
    %273 = vmatpush1.msra.mxu0 %v94
    %274 = vmatprep.subr.mxu0 0.0
    %275 = vmatpush1.msra.mxu0 %v93
    %276 = vmatprep.subr.mxu0 0.0
    %277 = vmatpush1.msra.mxu0 %v92
    %278 = vmatprep.subr.mxu0 0.0
    %279 = vmatpush1.msra.mxu0 %v91
    %280 = vmatprep.subr.mxu0 0.0
    %281 = vmatpush1.msra.mxu0 %v90
    %282 = vmatprep.subr.mxu0 0.0
    %283 = vmatpush1.msra.mxu0 %v89
    %284 = vmatprep.subr.mxu0 0.0
    %285 = vmatpush1.msra.mxu0 %v88
    %286 = vmatprep.subr.mxu0 0.0
    %287 = vmatpush1.msra.mxu0 %v87
    %288 = vmatprep.subr.mxu0 0.0
    %289 = vmatpush1.msra.mxu0 %v86
    %290 = vmatprep.subr.mxu0 0.0
    %291 = vmatpush1.msra.mxu0 %v85
    %292 = vmatprep.subr.mxu0 0.0
    %293 = vmatpush2.msra.mxu0 0.0
    %294 = vmatprep.subr.mxu0 0.0
    %295 = vmatpush2.msra.mxu0 0.0
    %296 = vmatprep.subr.mxu0 0.0
    %297 = vmatpush2.msra.mxu0 0.0
    %298 = vmatprep.subr.mxu0 0.0
    %299 = vmatpush2.msra.mxu0 0.0
    %300 = vmatprep.subr.mxu0 0.0
    %301 = vmatpush2.msra.mxu0 0.0
    %302 = vmatprep.subr.mxu0 0.0
    %303 = vmatpush2.msra.mxu0 0.0
    %304 = vmatprep.subr.mxu0 0.0
    %305 = vmatpush2.msra.mxu0 0.0
    %306 = vmatprep.subr.mxu0 0.0
    %307 = vmatpush2.msra.mxu0 0.0
    %308 = vmatprep.subr.mxu0 0.0
    %309 = vmatpush2.msra.mxu0 0.0
    %310 = vmatprep.subr.mxu0 0.0
    %311 = vmatpush2.msra.mxu0 0.0
    %312 = vmatprep.subr.mxu0 0.0
    %313 = vmatpush2.msra.mxu0 0.0
    %314 = vmatprep.subr.mxu0 0.0
    %315 = vmatpush2.msra.mxu0 0.0
    %316 = vmatprep.subr.mxu0 0.0
    %317 = vmatpush2.msra.mxu0 0.0
    %318 = vmatprep.subr.mxu0 0.0
    %319 = vmatpush2.msra.mxu0 0.0
    %320 = vmatprep.subr.mxu0 0.0
    %321 = vmatpush2.msra.mxu0 0.0
    %322 = vmatprep.subr.mxu0 0.0
    %323 = vmatpush2.msra.mxu0 0.0
    %324 = vmatprep.mubr.f32.mxu0 0.0
    %325 = vmatmul.mubr.f32.gmra.mxu0 %v255
    %v326 = vpop.f32.mrf.mxu0
    %v327 = vadd.f32 %v259, %v326
    %v328 = vpop.f32.mrf.mxu0
    %329 = vdwg.mxu0
    %v330 = vlaneseq
    %v331 = vand.u32 %v330, 127
    %vm332 = vcmp.lt.s32.totalorder %v331, 5
    %vm333 = vcmp.ne.f32.partialorder %v327, %v327
    %v334 = vsel %vm333, 1.0, %v327
    %v335 = vtanh.pop %v334
    %v336 = vsel %vm332, %v335, %v327
    %337 = vst [vmem:[#allocation8] sm:$0xff] %v336
    // Predicated region
    $region26: #{tpu_custom_call.1} parent=1 // pred_check
      _
    $region27: #{tpu_custom_call.1} parent=1 // pred_check_branch
      %339 = sbr.rel (0) target = $region29
    $region28: #{tpu_custom_call.1} parent=1 // pred_region
      %s341 = ssub.s32 128, 128
      %342 = vsyncadd [#allocation4], %s341
      %s344 = sshll.u32 [#allocation8], 4
      %s345 = int_to_ptr.vmem [resolvable:$true] %s344
      %347 = dma.vmem_to_hbm [thread:$0]  %s345, 128, %s3, [#allocation4]
    $region29: #{tpu_custom_call.1} parent=1 // pred_fallthru
      _
    // Predicated region
    $region30: #{tpu_custom_call.1} parent=1 // pred_check
      _
    $region31: #{tpu_custom_call.1} parent=1 // pred_check_branch
      %349 = sbr.rel (0) target = $region33
    $region32: #{tpu_custom_call.1} parent=1 // pred_region
      %350 = dma.done [#allocation4], 128
    $region33: #{tpu_custom_call.1} parent=1 // pred_fallthru
      _
    %351 = vsyncpa [#allocation3], 1
    %352 = vsyncpa [#allocation6], 1
    %353 = vsyncpa [#allocation4], 1

</llo_original>
